<compile_context>
chip_gen: v7x
topology: tpu7x:2x2x1
jax: 0.10.0
libtpu: 0.0.40
codegen_flags: <defaults>
</compile_context>

<pallas_src>
import functools

import jax
import jax.numpy as jnp
import numpy as np
from jax.experimental import pallas as pl
from jax.experimental.pallas import tpu as pltpu


def bconv_point_kernel(x_ref, w_ref, gamma_ref, o_ref, *, out_ch, maxout):
    # x_ref:     (Cin, tm)            f32  -- one tile of pixels, channels on sublanes
    # w_ref:     (maxout*out_ch, Cin) f32  -- pre-normalized weights, row k*out_ch + o
    # gamma_ref: (1,)                 f32  -- SMEM scalar
    # o_ref:     (out_ch, tm)         f32  -- lane-dense output tile
    x = x_ref[...]
    w = w_ref[...]

    # 1x1 conv == matmul on the MXU (weights already L2-normalized in the wrapper)
    y = jnp.dot(w, x, preferred_element_type=jnp.float32)  # (maxout*out_ch, tm)

    # maxout over the `maxout` copies of each output channel (static sublane slices)
    out = y[:out_ch, :]
    for k in range(1, maxout):
        out = jnp.maximum(out, y[k * out_ch:(k + 1) * out_ch, :])

    # per-pixel L2 norm of the input over channels, gamma folded into the reciprocal
    s = jnp.sum(x * x, axis=0, keepdims=True)               # (1, tm)
    inv = gamma_ref[0] / (jnp.sqrt(s) + 1e-12)               # (1, tm)

    o_ref[...] = (jnp.abs(out) * out) * inv                  # broadcast over sublanes


def bconv2d_point(x, w, gamma, *, out_ch, maxout, tm=512):
    """x: (N, Cin, H, W) f32; w: (out_ch*maxout, Cin, 1, 1) f32; gamma: (1,) f32."""
    N, Cin, H, W = x.shape
    M = N * H * W

    # NCHW -> (Cin, M): column j is pixel (n, h, w)
    x_cm = jnp.transpose(x, (1, 0, 2, 3)).reshape(Cin, M)

    # pad pixel count to a multiple of tm (padded pixels are zero -> output is zero)
    Mp = ((M + tm - 1) // tm) * tm
    if Mp != M:
        x_cm = jnp.pad(x_cm, ((0, 0), (0, Mp - M)))

    # (O*m, Cin, 1, 1): conv channel c uses weight row c, c <-> (o=c//m, k=c%m).
    # Reorder rows to k*out_ch + o so maxout groups are contiguous sublane slabs.
    w2 = w[:, :, 0, 0].reshape(out_ch, maxout, Cin)           # (O, m, Cin)
    w_mat = jnp.transpose(w2, (1, 0, 2)).reshape(maxout * out_ch, Cin)

    # Hoisted weight normalization: F.normalize(w, p=2, dim=1), eps=1e-12
    w_norm = jnp.sqrt(jnp.sum(w_mat * w_mat, axis=1, keepdims=True))
    w_mat = w_mat / jnp.maximum(w_norm, 1e-12)

    kern = functools.partial(bconv_point_kernel, out_ch=out_ch, maxout=maxout)

    # VMEM budget: double-buffered x/out tiles + resident weight block (f32 bytes).
    vmem_needed = (2 * Cin * tm + 2 * out_ch * tm + maxout * out_ch * Cin) * 4
    cp_kwargs = dict(dimension_semantics=("parallel",))
    if vmem_needed > 24 * 1024 * 1024:
        # Only raise the scoped limit when a big tile needs it; stay under v7x 64 MiB.
        cp_kwargs["vmem_limit_bytes"] = min(2 * vmem_needed, 60 * 1024 * 1024)

    y = pl.pallas_call(
        kern,
        out_shape=jax.ShapeDtypeStruct((out_ch, Mp), jnp.float32),
        grid=(Mp // tm,),
        in_specs=[
            pl.BlockSpec((Cin, tm), lambda i: (0, i)),
            pl.BlockSpec((maxout * out_ch, Cin), lambda i: (0, 0)),
            pl.BlockSpec(memory_space=pltpu.MemorySpace.SMEM),
        ],
        out_specs=pl.BlockSpec((out_ch, tm), lambda i: (0, i)),
        compiler_params=pltpu.CompilerParams(**cp_kwargs),
    )(x_cm, w_mat, gamma)

    # (out_ch, Mp) -> drop padding -> (N, out_ch, H, W)
    y = y[:, :M].reshape(out_ch, N, H, W)
    return jnp.transpose(y, (1, 0, 2, 3))


def reference_forward(x, w, gamma, *, out_ch, maxout):
    """Pure-JAX reference matching the PyTorch module."""
    w2 = w[:, :, 0, 0]                                        # (O*m, Cin)
    wn = w2 / jnp.maximum(
        jnp.sqrt(jnp.sum(w2 * w2, axis=1, keepdims=True)), 1e-12)
    y = jnp.einsum("nchw,oc->nohw", x, wn)
    if maxout > 1:
        N, _, H, W = x.shape
        y = y.reshape(N, out_ch, maxout, H, W).max(axis=2)
    norm = jnp.sqrt(jnp.sum(x * x, axis=1, keepdims=True)) + 1e-12
    return (jnp.abs(y) / norm) * y * gamma[0]


if __name__ == "__main__":
    inp, out_ch, maxout = 4, 8, 2
    N, H, W = 2, 16, 16

    key = jax.random.PRNGKey(0)
    kx, kw = jax.random.split(key)
    x = jax.random.normal(kx, (N, inp, H, W), dtype=jnp.float32)
    w = jax.random.normal(kw, (out_ch * maxout, inp, 1, 1), dtype=jnp.float32)
    gamma = jnp.array([90.0], dtype=jnp.float32)

    y = bconv2d_point(x, w, gamma, out_ch=out_ch, maxout=maxout)
    y = jax.block_until_ready(y)

    y_ref = reference_forward(x, w, gamma, out_ch=out_ch, maxout=maxout)
    np.testing.assert_allclose(np.asarray(y), np.asarray(y_ref),
                               rtol=1e-5, atol=1e-4)
    print("KERNEL_OK")
</pallas_src>

<mosaic_0001>
module attributes {stable_mosaic.version = 11 : i64} {
  func.func @bconv_point_kernel(%arg0: i32, %arg1: memref<4x512xf32, #tpu.memory_space<vmem>>, %arg2: memref<16x4xf32, #tpu.memory_space<vmem>>, %arg3: memref<1xf32, #tpu.memory_space<smem>>, %arg4: memref<8x512xf32, #tpu.memory_space<vmem>>) attributes {dimension_semantics = [#tpu.dimension_semantics<parallel>], iteration_bounds = array<i64: 1>, scalar_prefetch = 0 : i64, scratch_operands = 0 : i64, tpu.core_type = #tpu.core_type<tc>, window_params = [{transform_indices = @transform_0, window_bounds = array<i64: 4, 512>}, {pipeline_mode = #tpu.pipeline_mode<synchronous>, transform_indices = @transform_1, window_bounds = array<i64: 16, 4>}, {transform_indices = @transform_2, window_bounds = array<i64: 1>}, {transform_indices = @transform_3, window_bounds = array<i64: 8, 512>}]} {
    %c0 = arith.constant 0 : index
    %c0_0 = arith.constant 0 : index
    %0 = vector.load %arg1[%c0, %c0_0] : memref<4x512xf32, #tpu.memory_space<vmem>>, vector<4x512xf32>
    %c0_1 = arith.constant 0 : index
    %c0_2 = arith.constant 0 : index
    %1 = vector.load %arg2[%c0_1, %c0_2] : memref<16x4xf32, #tpu.memory_space<vmem>>, vector<16x4xf32>
    %cst = arith.constant dense<0.000000e+00> : vector<16x512xf32>
    %2 = tpu.matmul %1, %0, %cst {dimension_numbers = #tpu.dot_dimension_numbers<[1], [0], [0], [1], [0, 0, 1, 1], [], []>} : vector<16x4xf32>, vector<4x512xf32>, vector<16x512xf32> -> vector<16x512xf32>
    %3 = vector.extract_strided_slice %2 {offsets = [0, 0], sizes = [8, 512], strides = [1, 1]} : vector<16x512xf32> to vector<8x512xf32>
    %4 = vector.extract_strided_slice %2 {offsets = [8, 0], sizes = [8, 512], strides = [1, 1]} : vector<16x512xf32> to vector<8x512xf32>
    %5 = arith.maximumf %3, %4 : vector<8x512xf32>
    %6 = arith.mulf %0, %0 : vector<4x512xf32>
    %cst_3 = arith.constant dense<0.000000e+00> : vector<512xf32>
    %7 = vector.multi_reduction <add>, %6, %cst_3 [0] : vector<4x512xf32> to vector<512xf32>
    %8 = vector.shape_cast %7 : vector<512xf32> to vector<1x512xf32>
    %c0_4 = arith.constant 0 : index
    %9 = memref.load %arg3[%c0_4] : memref<1xf32, #tpu.memory_space<smem>>
    %10 = math.sqrt %8 : vector<1x512xf32>
    %cst_5 = arith.constant 9.99999996E-13 : f32
    %11 = vector.broadcast %cst_5 : f32 to vector<1x512xf32>
    %12 = arith.addf %10, %11 : vector<1x512xf32>
    %13 = vector.broadcast %9 : f32 to vector<1x512xf32>
    %14 = arith.divf %13, %12 : vector<1x512xf32>
    %15 = math.absf %5 : vector<8x512xf32>
    %16 = arith.mulf %15, %5 : vector<8x512xf32>
    %17 = vector.broadcast %14 : vector<1x512xf32> to vector<8x512xf32>
    %18 = arith.mulf %16, %17 : vector<8x512xf32>
    %c0_6 = arith.constant 0 : index
    %c0_7 = arith.constant 0 : index
    %19 = vector.load %arg4[%c0_6, %c0_7] : memref<8x512xf32, #tpu.memory_space<vmem>>, vector<8x512xf32>
    tpu.vector_store %arg4[%c0_6, %c0_7], %18 {strides = array<i32>} : memref<8x512xf32, #tpu.memory_space<vmem>>, vector<8x512xf32>,
    return
  }
  func.func @transform_0(%arg0: i32) -> (i32, i32) {
    %c0_i32 = arith.constant 0 : i32
    %c0_i32_0 = arith.constant 0 : i32
    return %c0_i32, %arg0 : i32, i32
  }
  func.func @transform_1(%arg0: i32) -> (i32, i32) {
    %c0_i32 = arith.constant 0 : i32
    %c0_i32_0 = arith.constant 0 : i32
    %c0_i32_1 = arith.constant 0 : i32
    return %c0_i32, %c0_i32_0 : i32, i32
  }
  func.func @transform_2(%arg0: i32) -> i32 {
    %c0_i32 = arith.constant 0 : i32
    %c0_i32_0 = arith.constant 0 : i32
    return %c0_i32 : i32
  }
  func.func @transform_3(%arg0: i32) -> (i32, i32) {
    %c0_i32 = arith.constant 0 : i32
    %c0_i32_0 = arith.constant 0 : i32
    return %c0_i32, %arg0 : i32, i32
  }
}

</mosaic_0001>

<llo_original>
// kernel: tpu_custom_call.1
$region0: #{tpu_custom_call.1}
  #allocation0 [shape = 'u32[]', space=smem, size = 0x4, offset = 0x4, fixed_abs, tag = 'smem constant byte address 0x4 - core index']
  #allocation1 [shape = 'u32[144,128]{1,0:T(1,128)}', space=vmem, size = 0x12000, scoped, tag = 'internal scratch']
  #allocation2 [shape = 'f32[1]{0:T(128)S(6)}', space=smem, size = 0x200, scoped, tag = 'scoped memory for tpu_custom_call.1']
  %s0 = inlined_call_operand.vmem [shape: f32[4,512], index: 0, kind: input, shape index: {}]
  %s1 = inlined_call_operand.vmem [shape: f32[16,4], index: 1, kind: input, shape index: {}]
  %s2 = inlined_call_operand.<no memory space> [shape: f32[1], index: 2, kind: input, shape index: {}]
  %s3 = inlined_call_operand.hbm [shape: f32[8,512], index: 3, kind: output, shape index: {}]
  %s4 = sld [smem:[#allocation0]]
  $region22: #{tpu_custom_call.1} parent=0
    _
  %s6 = ssub.s32 1, %s4
  %s7 = scalar_select 0, %s6, %s4
  %8 = sst [smem:[#allocation2]] %s2
  $region1: #{tpu_custom_call.1} parent=0
    #allocation3 [shape = 'u8[16384]{0}', space=vmem, size = 0x4000, scoped, tag = 'output window, operand 0, single buffered']
    #allocation4 [shape = 's32[1]{0}', space=sflag, size = 0x4, scoped, tag = 'scoped memory for tpu_custom_call.1']
    %9 = vsyncpa [#allocation4], 0
    // Predicated region
    $region2: #{tpu_custom_call.1} parent=1 // pred_check
      _
    $region3: #{tpu_custom_call.1} parent=1 // pred_check_branch
      %11 = sbr.rel (0) target = $region5
    $region4: #{tpu_custom_call.1} parent=1 // pred_region
      _
    $region5: #{tpu_custom_call.1} parent=1 // pred_fallthru
      _
    // Predicated region
    $region6: #{tpu_custom_call.1} parent=1 // pred_check
      _
    $region7: #{tpu_custom_call.1} parent=1 // pred_check_branch
      %13 = sbr.rel (0) target = $region9
    $region8: #{tpu_custom_call.1} parent=1 // pred_region
      _
    $region9: #{tpu_custom_call.1} parent=1 // pred_fallthru
      _
    // Predicated region
    $region10: #{tpu_custom_call.1} parent=1 // pred_check
      _
    $region11: #{tpu_custom_call.1} parent=1 // pred_check_branch
      %15 = sbr.rel (0) target = $region13
    $region12: #{tpu_custom_call.1} parent=1 // pred_region
      _
    $region13: #{tpu_custom_call.1} parent=1 // pred_fallthru
      _
    %v16 = vld [vmem:[%s0] sm:$0xff]
    %v17 = vld [vmem:[%s0 + $0x8] sm:$0xff]
    %v18 = vld [vmem:[%s1] sm:$0xff]
    %v19 = vld [vmem:[%s1 + $0x8] sm:$0xff]
    %v22 = vcombine.high %v16, %v16
    %v23 = vcombine.high %v17, %v17
    %vm24 = vcmask 31744
    %v26 = vsel %vm24, %v18, 0
    %v29 = vsel %vm24, %v19, 0
    %vm31 = vcmask 1043456
    %v32 = vsel %vm31, %v16, 0
    %v34 = vsel %vm31, %v22, 0
    %v36 = vsel %vm31, %v17, 0
    %v38 = vsel %vm31, %v23, 0
    %40 = vmatprep.subr.mxu0 %v34
    %41 = vmatpush1.msra.mxu0 %v32
    %42 = vmatprep.subr.mxu0 0.0
    %43 = vmatpush1.msra.mxu0 0.0
    %44 = vmatprep.subr.mxu0 0.0
    %45 = vmatpush1.msra.mxu0 0.0
    %46 = vmatprep.subr.mxu0 0.0
    %47 = vmatpush1.msra.mxu0 0.0
    %48 = vmatprep.subr.mxu0 0.0
    %49 = vmatpush1.msra.mxu0 0.0
    %50 = vmatprep.subr.mxu0 0.0
    %51 = vmatpush1.msra.mxu0 0.0
    %52 = vmatprep.subr.mxu0 0.0
    %53 = vmatpush1.msra.mxu0 0.0
    %54 = vmatprep.subr.mxu0 0.0
    %55 = vmatpush1.msra.mxu0 0.0
    %56 = vmatprep.subr.mxu0 0.0
    %57 = vmatpush1.msra.mxu0 0.0
    %58 = vmatprep.subr.mxu0 0.0
    %59 = vmatpush1.msra.mxu0 0.0
    %60 = vmatprep.subr.mxu0 0.0
    %61 = vmatpush1.msra.mxu0 0.0
    %62 = vmatprep.subr.mxu0 0.0
    %63 = vmatpush1.msra.mxu0 0.0
    %64 = vmatprep.subr.mxu0 0.0
    %65 = vmatpush1.msra.mxu0 0.0
    %66 = vmatprep.subr.mxu0 0.0
    %67 = vmatpush1.msra.mxu0 0.0
    %68 = vmatprep.subr.mxu0 0.0
    %69 = vmatpush1.msra.mxu0 0.0
    %70 = vmatprep.subr.mxu0 0.0
    %71 = vmatpush1.msra.mxu0 0.0
    %72 = vmatprep.subr.mxu0 0.0
    %73 = vmatpush1.msra.mxu0 0.0
    %74 = vmatprep.subr.mxu0 0.0
    %75 = vmatpush1.msra.mxu0 0.0
    %76 = vmatprep.subr.mxu0 0.0
    %77 = vmatpush1.msra.mxu0 0.0
    %78 = vmatprep.subr.mxu0 0.0
    %79 = vmatpush1.msra.mxu0 0.0
    %80 = vmatprep.subr.mxu0 0.0
    %81 = vmatpush1.msra.mxu0 0.0
    %82 = vmatprep.subr.mxu0 0.0
    %83 = vmatpush1.msra.mxu0 0.0
    %84 = vmatprep.subr.mxu0 0.0
    %85 = vmatpush1.msra.mxu0 0.0
    %86 = vmatprep.subr.mxu0 0.0
    %87 = vmatpush1.msra.mxu0 0.0
    %88 = vmatprep.subr.mxu0 0.0
    %89 = vmatpush1.msra.mxu0 0.0
    %90 = vmatprep.subr.mxu0 0.0
    %91 = vmatpush1.msra.mxu0 0.0
    %92 = vmatprep.subr.mxu0 0.0
    %93 = vmatpush1.msra.mxu0 0.0
    %94 = vmatprep.subr.mxu0 0.0
    %95 = vmatpush1.msra.mxu0 0.0
    %96 = vmatprep.subr.mxu0 0.0
    %97 = vmatpush1.msra.mxu0 0.0
    %98 = vmatprep.subr.mxu0 0.0
    %99 = vmatpush1.msra.mxu0 0.0
    %100 = vmatprep.subr.mxu0 0.0
    %101 = vmatpush1.msra.mxu0 0.0
    %102 = vmatprep.subr.mxu0 0.0
    %103 = vmatpush1.msra.mxu0 0.0
    %104 = vmatprep.mubr.f32.mxu0 0.0
    %105 = vmatmul.mubr.f32.gmra.mrb[0].mxu0 %v26
    %v106 = vpop.f32.mrb[0].mxu0
    %v107 = vadd.f32 0.0, %v106
    %v108 = vpop.f32.mrb[0].mxu0
    %v109 = vadd.f32 0.0, %v108
    %110 = vmatprep.mubr.f32.mxu0 0.0
    %111 = vmatmul.mubr.f32.gmra.mrb[0].mxu0 %v29
    %v112 = vpop.f32.mrb[0].mxu0
    %v113 = vadd.f32 0.0, %v112
    %v114 = vpop.f32.mrb[0].mxu0
    %v115 = vadd.f32 0.0, %v114
    %116 = vdwg.mxu0
    %117 = vmatprep.subr.mxu0 %v38
    %118 = vmatpush1.msra.mxu0 %v36
    %119 = vmatprep.subr.mxu0 0.0
    %120 = vmatpush1.msra.mxu0 0.0
    %121 = vmatprep.subr.mxu0 0.0
    %122 = vmatpush1.msra.mxu0 0.0
    %123 = vmatprep.subr.mxu0 0.0
    %124 = vmatpush1.msra.mxu0 0.0
    %125 = vmatprep.subr.mxu0 0.0
    %126 = vmatpush1.msra.mxu0 0.0
    %127 = vmatprep.subr.mxu0 0.0
    %128 = vmatpush1.msra.mxu0 0.0
    %129 = vmatprep.subr.mxu0 0.0
    %130 = vmatpush1.msra.mxu0 0.0
    %131 = vmatprep.subr.mxu0 0.0
    %132 = vmatpush1.msra.mxu0 0.0
    %133 = vmatprep.subr.mxu0 0.0
    %134 = vmatpush1.msra.mxu0 0.0
    %135 = vmatprep.subr.mxu0 0.0
    %136 = vmatpush1.msra.mxu0 0.0
    %137 = vmatprep.subr.mxu0 0.0
    %138 = vmatpush1.msra.mxu0 0.0
    %139 = vmatprep.subr.mxu0 0.0
    %140 = vmatpush1.msra.mxu0 0.0
    %141 = vmatprep.subr.mxu0 0.0
    %142 = vmatpush1.msra.mxu0 0.0
    %143 = vmatprep.subr.mxu0 0.0
    %144 = vmatpush1.msra.mxu0 0.0
    %145 = vmatprep.subr.mxu0 0.0
    %146 = vmatpush1.msra.mxu0 0.0
    %147 = vmatprep.subr.mxu0 0.0
    %148 = vmatpush1.msra.mxu0 0.0
    %149 = vmatprep.subr.mxu0 0.0
    %150 = vmatpush1.msra.mxu0 0.0
    %151 = vmatprep.subr.mxu0 0.0
    %152 = vmatpush1.msra.mxu0 0.0
    %153 = vmatprep.subr.mxu0 0.0
    %154 = vmatpush1.msra.mxu0 0.0
    %155 = vmatprep.subr.mxu0 0.0
    %156 = vmatpush1.msra.mxu0 0.0
    %157 = vmatprep.subr.mxu0 0.0
    %158 = vmatpush1.msra.mxu0 0.0
    %159 = vmatprep.subr.mxu0 0.0
    %160 = vmatpush1.msra.mxu0 0.0
    %161 = vmatprep.subr.mxu0 0.0
    %162 = vmatpush1.msra.mxu0 0.0
    %163 = vmatprep.subr.mxu0 0.0
    %164 = vmatpush1.msra.mxu0 0.0
    %165 = vmatprep.subr.mxu0 0.0
    %166 = vmatpush1.msra.mxu0 0.0
    %167 = vmatprep.subr.mxu0 0.0
    %168 = vmatpush1.msra.mxu0 0.0
    %169 = vmatprep.subr.mxu0 0.0
    %170 = vmatpush1.msra.mxu0 0.0
    %171 = vmatprep.subr.mxu0 0.0
    %172 = vmatpush1.msra.mxu0 0.0
    %173 = vmatprep.subr.mxu0 0.0
    %174 = vmatpush1.msra.mxu0 0.0
    %175 = vmatprep.subr.mxu0 0.0
    %176 = vmatpush1.msra.mxu0 0.0
    %177 = vmatprep.subr.mxu0 0.0
    %178 = vmatpush1.msra.mxu0 0.0
    %179 = vmatprep.subr.mxu0 0.0
    %180 = vmatpush1.msra.mxu0 0.0
    %181 = vmatprep.mubr.f32.mxu0 0.0
    %182 = vmatmul.mubr.f32.gmra.mrb[0].mxu0 %v26
    %v183 = vpop.f32.mrb[0].mxu0
    %v184 = vadd.f32 0.0, %v183
    %v185 = vpop.f32.mrb[0].mxu0
    %v186 = vadd.f32 0.0, %v185
    %187 = vmatprep.mubr.f32.mxu0 0.0
    %188 = vmatmul.mubr.f32.gmra.mrb[0].mxu0 %v29
    %v189 = vpop.f32.mrb[0].mxu0
    %v190 = vadd.f32 0.0, %v189
    %v191 = vpop.f32.mrb[0].mxu0
    %v192 = vadd.f32 0.0, %v191
    %193 = vdwg.mxu0
    %v194 = vmax.f32 %v107, %v113
    %v195 = vmax.f32 %v109, %v115
    %v196 = vmax.f32 %v184, %v190
    %v197 = vmax.f32 %v186, %v192
    %v198 = vmul.f32 %v16, %v16
    %v199 = vmul.f32 %v17, %v17
    %v202 = vcombine.high %v198, %v198
    %v203 = vcombine.high %v199, %v199
    %v206 = vsel %vm31, %v198, 0.0
    %v207 = vrot.slane %v206, 4
    %v208 = vadd.f32 %v206, %v207
    %v209 = vrot.slane %v208, 2
    %v210 = vadd.f32 %v208, %v209
    %v211 = vrot.slane %v210, 1
    %v212 = vadd.f32 %v210, %v211
    %v213 = vsel %vm31, %v202, 0.0
    %v214 = vrot.slane %v213, 4
    %v215 = vadd.f32 %v213, %v214
    %v216 = vrot.slane %v215, 2
    %v217 = vadd.f32 %v215, %v216
    %v218 = vrot.slane %v217, 1
    %v219 = vadd.f32 %v217, %v218
    %v220 = vsel %vm31, %v199, 0.0
    %v221 = vrot.slane %v220, 4
    %v222 = vadd.f32 %v220, %v221
    %v223 = vrot.slane %v222, 2
    %v224 = vadd.f32 %v222, %v223
    %v225 = vrot.slane %v224, 1
    %v226 = vadd.f32 %v224, %v225
    %v227 = vsel %vm31, %v203, 0.0
    %v228 = vrot.slane %v227, 4
    %v229 = vadd.f32 %v227, %v228
    %v230 = vrot.slane %v229, 2
    %v231 = vadd.f32 %v229, %v230
    %v232 = vrot.slane %v231, 1
    %v233 = vadd.f32 %v231, %v232
    %s234 = sld [smem:[#allocation2]]
    %v235 = vrsqrt.pop %v212
    %v236 = vmul.f32 %v212, %v235
    %vm237 = vcmp.eq.f32.partialorder %v212, inf
    %v238 = vsel %vm237, %v212, %v236
    %vm239 = vcmp.eq.f32.partialorder %v212, 0.0
    %v240 = vand.u32 %v212, 2147483648
    %v241 = vsel %vm239, %v240, %v238
    %v242 = vrsqrt.pop %v219
    %v243 = vmul.f32 %v219, %v242
    %vm244 = vcmp.eq.f32.partialorder %v219, inf
    %v245 = vsel %vm244, %v219, %v243
    %vm246 = vcmp.eq.f32.partialorder %v219, 0.0
    %v247 = vand.u32 %v219, 2147483648
    %v248 = vsel %vm246, %v247, %v245
    %v249 = vrsqrt.pop %v226
    %v250 = vmul.f32 %v226, %v249
    %vm251 = vcmp.eq.f32.partialorder %v226, inf
    %v252 = vsel %vm251, %v226, %v250
    %vm253 = vcmp.eq.f32.partialorder %v226, 0.0
    %v254 = vand.u32 %v226, 2147483648
    %v255 = vsel %vm253, %v254, %v252
    %v256 = vrsqrt.pop %v233
    %v257 = vmul.f32 %v233, %v256
    %vm258 = vcmp.eq.f32.partialorder %v233, inf
    %v259 = vsel %vm258, %v233, %v257
    %vm260 = vcmp.eq.f32.partialorder %v233, 0.0
    %v261 = vand.u32 %v233, 2147483648
    %v262 = vsel %vm260, %v261, %v259
    %v263 = vadd.f32 %v241, 1e-12
    %v264 = vadd.f32 %v248, 1e-12
    %v265 = vadd.f32 %v255, 1e-12
    %v266 = vadd.f32 %v262, 1e-12
    %v267 = vstv %s234
    %v268 = vrcp.pop %v263
    %v269 = vmul.f32 %v267, %v268
    %v270 = vrcp.pop %v264
    %v271 = vmul.f32 %v267, %v270
    %v272 = vrcp.pop %v265
    %v273 = vmul.f32 %v267, %v272
    %v274 = vrcp.pop %v266
    %v275 = vmul.f32 %v267, %v274
    %v276 = vand.u32 2147483647, %v194
    %v277 = vand.u32 2147483647, %v195
    %v278 = vand.u32 2147483647, %v196
    %v279 = vand.u32 2147483647, %v197
    %v280 = vmul.f32 %v276, %v194
    %v281 = vmul.f32 %v277, %v195
    %v282 = vmul.f32 %v278, %v196
    %v283 = vmul.f32 %v279, %v197
    %v284 = vmul.f32 %v280, %v269
    %v285 = vmul.f32 %v281, %v271
    %v286 = vmul.f32 %v282, %v273
    %v287 = vmul.f32 %v283, %v275
    %288 = vst [vmem:[#allocation3] sm:$0xff] %v284
    %289 = vst [vmem:[#allocation3 + $0x8] sm:$0xff] %v285
    %290 = vst [vmem:[#allocation3 + $0x10] sm:$0xff] %v286
    %291 = vst [vmem:[#allocation3 + $0x18] sm:$0xff] %v287
    // Predicated region
    $region14: #{tpu_custom_call.1} parent=1 // pred_check
      _
    $region15: #{tpu_custom_call.1} parent=1 // pred_check_branch
      %293 = sbr.rel (0) target = $region17
    $region16: #{tpu_custom_call.1} parent=1 // pred_region
      %s295 = ssub.s32 512, 512
      %296 = vsyncadd [#allocation4], %s295
      %s298 = sshll.u32 [#allocation3], 4
      %s299 = int_to_ptr.vmem [resolvable:$true] %s298
      %301 = dma.vmem_to_hbm [thread:$0]  %s299, 512, %s3, [#allocation4]
    $region17: #{tpu_custom_call.1} parent=1 // pred_fallthru
      _
    // Predicated region
    $region18: #{tpu_custom_call.1} parent=1 // pred_check
      _
    $region19: #{tpu_custom_call.1} parent=1 // pred_check_branch
      %303 = sbr.rel (0) target = $region21
    $region20: #{tpu_custom_call.1} parent=1 // pred_region
      %304 = dma.done [#allocation4], 512
    $region21: #{tpu_custom_call.1} parent=1 // pred_fallthru
      _
    %305 = vsyncpa [#allocation4], 1

</llo_original>
